<compile_context>
chip_gen: v5e
topology: v5e:2x2
jax: 0.10.0
libtpu: 0.0.40
codegen_flags: <defaults>
</compile_context>

<pallas_src>
import jax
import jax.numpy as jnp
from jax.experimental import pallas as pl
from jax.experimental.pallas import tpu as pltpu


def batch_sampler(a, b, c, y):
    """Pallas equivalent of BatchSampler.forward(a, b, c, y)."""
    del a, b, c  # unused by the forward pass, as in the PyTorch module
    n, d = y.shape
    assert n >= 2, "BatchSampler needs at least 2 solution vectors in the batch"

    # Doubled y: output row i is the contiguous slab yy[i+1 : i+n, :] (no wrap).
    yy = jnp.concatenate([y, y], axis=0)  # [2n, d], negligible HBM cost

    def kernel(yy_ref, o_ref):
        # yy_ref: [2n, d] resident in VMEM across the whole grid.
        # o_ref:  [n-1, d] output block for batch row i (leading dim squeezed).
        i = pl.program_id(0)
        # Rows (i+1) .. (i+n-1) of the doubled y == every other row, cyclic order.
        o_ref[...] = yy_ref[pl.ds(i + 1, n - 1), :]

    itemsize = jnp.dtype(y.dtype).itemsize
    cost = pl.CostEstimate(
        flops=0,
        transcendentals=0,
        bytes_accessed=(n * (n - 1) * d + 2 * n * d) * itemsize,
    )

    return pl.pallas_call(
        kernel,
        out_shape=jax.ShapeDtypeStruct((n, n - 1, d), y.dtype),
        grid_spec=pltpu.PrefetchScalarGridSpec(
            num_scalar_prefetch=0,
            grid=(n,),
            # yy is fetched once and stays resident (constant block index).
            in_specs=[pl.BlockSpec((2 * n, d), lambda i: (0, 0))],
            # One output row per grid step; auto-pipelined store.
            out_specs=pl.BlockSpec((None, n - 1, d), lambda i: (i, 0, 0)),
        ),
        compiler_params=pltpu.CompilerParams(
            dimension_semantics=("parallel",),  # batch rows are independent
        ),
        cost_estimate=cost,
    )(yy)


if __name__ == "__main__":
    key = jax.random.PRNGKey(0)
    k_a, k_b, k_c, k_y = jax.random.split(key, 4)

    n, m, d = 8, 4, 32  # batch (solution vectors), num_constraints, num_vars
    a = jax.random.normal(k_a, (n, m, d), dtype=jnp.float32)  # unused
    b = jax.random.normal(k_b, (n, m), dtype=jnp.float32)     # unused
    c = jax.random.normal(k_c, (n, d), dtype=jnp.float32)     # unused
    y = jax.random.normal(k_y, (n, d), dtype=jnp.float32)     # candidate solutions

    out = jax.block_until_ready(batch_sampler(a, b, c, y))

    # Reference: plain-JAX mirror of the PyTorch forward.
    idx = jnp.remainder(
        jnp.arange(n - 1)[None, :] + jnp.arange(1, n + 1)[:, None], n
    )
    ref = y[idx]
    assert out.shape == (n, n - 1, d)
    assert out.dtype == y.dtype
    assert jnp.array_equal(out, ref), "mismatch vs reference"

    print("KERNEL_OK")
</pallas_src>

<mosaic_0001>
module attributes {stable_mosaic.version = 11 : i64} {
  func.func @kernel(%arg0: i32, %arg1: memref<16x32xf32, #tpu.memory_space<vmem>>, %arg2: memref<1x7x32xf32, #tpu.memory_space<vmem>>) attributes {dimension_semantics = [#tpu.dimension_semantics<parallel>], iteration_bounds = array<i64: 8>, scalar_prefetch = 0 : i64, scratch_operands = 0 : i64, tpu.core_type = #tpu.core_type<tc>, window_params = [{pipeline_mode = #tpu.pipeline_mode<synchronous>, transform_indices = @transform_0, window_bounds = array<i64: 16, 32>}, {transform_indices = @transform_1, window_bounds = array<i64: 1, 7, 32>}]} {
    %c1_i32 = arith.constant 1 : i32
    %0 = arith.addi %arg0, %c1_i32 : i32
    %1 = arith.index_cast %0 : i32 to index
    %c0 = arith.constant 0 : index
    %2 = vector.load %arg1[%1, %c0] : memref<16x32xf32, #tpu.memory_space<vmem>>, vector<7x32xf32>
    %c0_0 = arith.constant 0 : index
    %c0_1 = arith.constant 0 : index
    %c0_2 = arith.constant 0 : index
    %3 = vector.load %arg2[%c0_0, %c0_1, %c0_2] : memref<1x7x32xf32, #tpu.memory_space<vmem>>, vector<1x7x32xf32>
    %4 = vector.shape_cast %3 : vector<1x7x32xf32> to vector<7x32xf32>
    %5 = vector.shape_cast %2 : vector<7x32xf32> to vector<1x7x32xf32>
    tpu.vector_store %arg2[%c0_0, %c0_1, %c0_2], %5 {strides = array<i32>} : memref<1x7x32xf32, #tpu.memory_space<vmem>>, vector<1x7x32xf32>,
    return
  }
  func.func @transform_0(%arg0: i32) -> (i32, i32) {
    %c0_i32 = arith.constant 0 : i32
    %c0_i32_0 = arith.constant 0 : i32
    %c0_i32_1 = arith.constant 0 : i32
    return %c0_i32, %c0_i32_0 : i32, i32
  }
  func.func @transform_1(%arg0: i32) -> (i32, i32, i32) {
    %c0_i32 = arith.constant 0 : i32
    %c0_i32_0 = arith.constant 0 : i32
    %c0_i32_1 = arith.constant 0 : i32
    return %arg0, %c0_i32, %c0_i32_0 : i32, i32, i32
  }
}

</mosaic_0001>

<llo_original>
// kernel: tpu_custom_call.1
$region0: #{tpu_custom_call.1}
  #allocation0 [shape = 'u32[]', space=smem, size = 0x4, offset = 0x4, fixed_abs, tag = 'smem constant byte address 0x4 - core index']
  #allocation1 [shape = 'u32[72,128]{1,0:T(1,128)}', space=vmem, size = 0x9000, scoped, tag = 'internal scratch']
  %s0 = inlined_call_operand.hbm [shape: f32[16,32], index: 0, kind: input, shape index: {}]
  %s1 = inlined_call_operand.vmem [shape: f32[8,7,32], index: 1, kind: output, shape index: {}]
  %s2 = sld [smem:[#allocation0]]
  $region41: #{tpu_custom_call.1} parent=0
    _
  %s4 = ssub.s32 1, %s2
  %s5 = scalar_select 0, %s4, %s2
  $region1: #{tpu_custom_call.1} parent=0
    #allocation2 [shape = 'u8[8192]{0}', space=vmem, size = 0x2000, scoped, tag = 'input window, operand 0, single buffered']
    #allocation3 [shape = 's32[2]{0}', space=sflag, size = 0x8, scoped, tag = 'scoped memory for tpu_custom_call.1']
    %6 = vsyncpa [#allocation3], 0
    loop: start=0, step=1, limit=10
    $region2: #{tpu_custom_call.1} parent=1 // loop_pre_header
      _
    $region3: #{tpu_custom_call.1} parent=1 // loop_header
      %s8 = sphi 0, %s12
      %p9 = scmp.ge.s32.totalorder %s8, 10
      %s16 = sphi 0, %s16
      %s18 = sphi 0, %s16
      %s19 = sphi 0, %s18
      %s33 = sphi 0, %s19
      %s39 = sphi 0, %s41
      %s42 = sphi 0, %s39
      %s43 = sphi 0, %s42
      %s59 = sphi 0, %s43
    $region4: #{tpu_custom_call.1} parent=1 // loop_header_branch
      %11 = sbr.rel (%p9) target = $region8
    $region5: #{tpu_custom_call.1} parent=1 // loop_body
      %s13 = ssub.s32 %s8, 1
      %s14 = ssub.s32 %s8, 2
      %s15 = sadd.s32 %s8, 1
      %s17 = sadd.s32 %s16, 1
      %p20 = scmp.eq.s32.totalorder %s8, 7
      %p21 = scmp.ne.s32.totalorder %s16, %s18
      %p22 = scmp.eq.s32.totalorder %s8, 0
      %p23 = por %p21, %p22
      %p24 = scmp.ne.s32.totalorder %s16, %s18
      %p25 = scmp.eq.s32.totalorder %s13, 7
      %p26 = por %p24, %p25
      %p27 = scmp.ne.s32.totalorder %s18, %s19
      %p28 = scmp.eq.s32.totalorder %s13, 0
      %p29 = por %p27, %p28
      %p30 = scmp.ne.s32.totalorder %s18, %s19
      %p31 = scmp.eq.s32.totalorder %s14, 7
      %p32 = por %p30, %p31
      %p34 = scmp.ne.s32.totalorder %s19, %s33
      %p35 = scmp.eq.s32.totalorder %s14, 0
      %p36 = por %p34, %p35
      %s37 = ssub.s32 %s8, %s15
      %p38 = scmp.eq.s32.totalorder %s37, 0
      %s40 = sadd.s32 %s39, 1
      %s41 = scalar_select %p38, %s39, %s40
      %p44 = pneg %p38
      %p45 = scmp.eq.s32.totalorder %s8, 7
      %p46 = por %p44, %p45
      %p47 = scmp.ne.s32.totalorder %s39, %s42
      %p48 = scmp.eq.s32.totalorder %s8, 0
      %p49 = por %p47, %p48
      %p50 = scmp.ne.s32.totalorder %s39, %s42
      %p51 = scmp.eq.s32.totalorder %s13, 7
      %p52 = por %p50, %p51
      %p53 = scmp.ne.s32.totalorder %s42, %s43
      %p54 = scmp.eq.s32.totalorder %s13, 0
      %p55 = por %p53, %p54
      %p56 = scmp.ne.s32.totalorder %s42, %s43
      %p57 = scmp.eq.s32.totalorder %s14, 7
      %p58 = por %p56, %p57
      %p60 = scmp.ne.s32.totalorder %s43, %s59
      %p61 = scmp.eq.s32.totalorder %s14, 0
      %p62 = por %p60, %p61
      %p63 = scmp.le.s32.totalorder 1, %s8
      %p64 = scmp.lt.s32.totalorder %s8, 9
      %p65 = pnand %p63, %p64
      %p66 = pneg %p65
      // Predicated region
      $region9: #{tpu_custom_call.1} parent=5 // pred_check
        _
      $region10: #{tpu_custom_call.1} parent=5 // pred_check_branch
        %68 = sbr.rel (%p65) target = $region12
      $region11: #{tpu_custom_call.1} parent=5 // pred_region
        %s69 = ssub.s32 %s8, 1
        // Predicated region
        $region13: #{tpu_custom_call.1} parent=11 // pred_check
          %p70 = pneg %p29
        $region14: #{tpu_custom_call.1} parent=11 // pred_check_branch
          %72 = sbr.rel (%p70) target = $region16
        $region15: #{tpu_custom_call.1} parent=11 // pred_region
          %74 = vsyncadd [#allocation3], 0
          %s75 = sshll.u32 %s0, 4
          %s76 = int_to_ptr.hbm [resolvable:$true] %s75
          %s77 = sshll.u32 [#allocation2], 4
          %s78 = int_to_ptr.vmem [resolvable:$true] %s77
          %83 = dma.hbm_to_vmem [thread:$0]  %s76, 256, %s78, [#allocation3], 128, 128, 8
        $region16: #{tpu_custom_call.1} parent=11 // pred_fallthru
          _
      $region12: #{tpu_custom_call.1} parent=5 // pred_fallthru
        _
      %p84 = scmp.lt.s32.totalorder %s8, 8
      // Predicated region
      $region17: #{tpu_custom_call.1} parent=5 // pred_check
        %p85 = pneg %p84
      $region18: #{tpu_custom_call.1} parent=5 // pred_check_branch
        %87 = sbr.rel (%p85) target = $region20
      $region19: #{tpu_custom_call.1} parent=5 // pred_region
        _
      $region20: #{tpu_custom_call.1} parent=5 // pred_fallthru
        _
      %p88 = scmp.le.s32.totalorder 1, %s8
      %p89 = scmp.lt.s32.totalorder %s8, 9
      %p90 = pnand %p88, %p89
      %p91 = pneg %p90
      // Predicated region
      $region21: #{tpu_custom_call.1} parent=5 // pred_check
        _
      $region22: #{tpu_custom_call.1} parent=5 // pred_check_branch
        %93 = sbr.rel (%p90) target = $region24
      $region23: #{tpu_custom_call.1} parent=5 // pred_region
        %s94 = ssub.s32 %s8, 1
        // Predicated region
        $region25: #{tpu_custom_call.1} parent=23 // pred_check
          %p95 = pneg %p29
        $region26: #{tpu_custom_call.1} parent=23 // pred_check_branch
          %97 = sbr.rel (%p95) target = $region28
        $region27: #{tpu_custom_call.1} parent=23 // pred_region
          %99 = dma.done [#allocation3], 256
        $region28: #{tpu_custom_call.1} parent=23 // pred_fallthru
          _
        %p100 = pneg %p29
        %p101 = pneg %p26
        %p102 = pneg %p55
        %p103 = pneg %p52
        %p104 = scmp.lt.s32.totalorder %s13, 7
        %s105 = scalar_select %p104, %s13, 7
        %s106 = smul.addr %s105, 8
        %s107 = scalar_lea.vmem %s1, %s106
        %p108 = scmp.lt.s32.totalorder %s13, 7
        %s109 = scalar_select %p108, %s13, 7
        %s110 = smul.addr %s109, 8
        %s111 = scalar_lea.vmem %s1, %s110
        %s112 = sadd.s32 %s13, 1
        %s113 = scalar_lea.vmem [#allocation2], %s112
        %v114 = vld [vmem:[%s113] sm:$0x7f]
        %vm115 = vcmask 260096
        %116 = vst.msk [vmem:[%s111] sm:$0x7f] %vm115, %v114
        %p117 = scmp.lt.s32.totalorder %s13, 7
        %s118 = scalar_select %p117, %s13, 7
        %s119 = smul.addr %s118, 8
        %s120 = scalar_lea.vmem %s1, %s119
        // Predicated region
        $region29: #{tpu_custom_call.1} parent=23 // pred_check
          %p121 = pneg %p52
        $region30: #{tpu_custom_call.1} parent=23 // pred_check_branch
          %123 = sbr.rel (%p121) target = $region32
        $region31: #{tpu_custom_call.1} parent=23 // pred_region
          _
        $region32: #{tpu_custom_call.1} parent=23 // pred_fallthru
          _
      $region24: #{tpu_custom_call.1} parent=5 // pred_fallthru
        _
      %p124 = scmp.le.s32.totalorder 2, %s8
      // Predicated region
      $region33: #{tpu_custom_call.1} parent=5 // pred_check
        %p125 = pneg %p124
      $region34: #{tpu_custom_call.1} parent=5 // pred_check_branch
        %127 = sbr.rel (%p125) target = $region36
      $region35: #{tpu_custom_call.1} parent=5 // pred_region
        %s128 = ssub.s32 %s8, 2
        // Predicated region
        $region37: #{tpu_custom_call.1} parent=35 // pred_check
          %p129 = pneg %p58
        $region38: #{tpu_custom_call.1} parent=35 // pred_check_branch
          %131 = sbr.rel (%p129) target = $region40
        $region39: #{tpu_custom_call.1} parent=35 // pred_region
          %p132 = scmp.lt.s32.totalorder %s14, 7
          %s133 = scalar_select %p132, %s14, 7
          %s134 = smul.addr %s133, 8
          %s135 = scalar_lea.vmem %s1, %s134
        $region40: #{tpu_custom_call.1} parent=35 // pred_fallthru
          _
      $region36: #{tpu_custom_call.1} parent=5 // pred_fallthru
        _
    $region6: #{tpu_custom_call.1} parent=1 // loop_footer
      %s12 = sadd.s32 1, %s8
    $region7: #{tpu_custom_call.1} parent=1 // loop_footer_branch
      %7 = sbr.rel target = $region3
    $region8: #{tpu_custom_call.1} parent=1 // loop_exit
      _
    %136 = vsyncpa [#allocation3], 1
    %s137 = scalar_lea.sflag [#allocation3], 1
    %138 = vsyncpa %s137, 1

</llo_original>
